<compile_context>
chip_gen: v5e
topology: v5e:2x2
jax: 0.10.0
libtpu: 0.0.40
codegen_flags: <defaults>
</compile_context>

<pallas_src>
import functools
import math

import jax
import jax.numpy as jnp
from jax.experimental import pallas as pl
from jax.experimental.pallas import tpu as pltpu


def _noise_kernel(*refs, std, has_hn):
    """out = x + std * N(0,1) (+ had_noise).

    b1/b2 hold 32 random bits per element for HALF of the lanes; the cos and
    sin branches of Box-Muller fill the low/high lane halves respectively, so
    every output element gets an independent standard normal.
    """
    if has_hn:
        x_ref, b1_ref, b2_ref, hn_ref, o_ref = refs
    else:
        x_ref, b1_ref, b2_ref, o_ref = refs
        hn_ref = None

    half = b1_ref.shape[-1]

    # 23 random bits -> uniform in (0, 1), bounded away from 0 (log stays finite).
    mask23 = jnp.int32(0x7FFFFF)
    inv23 = jnp.float32(1.0 / (1 << 23))
    u1 = (((b1_ref[...] >> 9) & mask23).astype(jnp.float32) + 0.5) * inv23
    u2 = (((b2_ref[...] >> 9) & mask23).astype(jnp.float32) + 0.5) * inv23

    # Box-Muller, using both outputs.
    r = jnp.float32(std) * jnp.sqrt(-2.0 * jnp.log(u1))
    theta = jnp.float32(2.0 * math.pi) * u2
    z_lo = r * jnp.cos(theta)
    z_hi = r * jnp.sin(theta)

    out_lo = x_ref[:, :half] + z_lo
    out_hi = x_ref[:, half:] + z_hi
    if has_hn:
        out_lo = out_lo + hn_ref[:, :half]
        out_hi = out_hi + hn_ref[:, half:]
    o_ref[:, :half] = out_lo
    o_ref[:, half:] = out_hi


def _pick_layout(total):
    # Widest lane-dense last dim that divides the flattened size.
    for lanes in (1024, 512, 256, 128):
        if total % lanes == 0:
            return total // lanes, lanes
    raise ValueError("flattened size must be a multiple of 128 lanes")


def _pick_tile_rows(rows, lanes):
    # Cap each f32 tile at ~1 MiB: with double-buffered in/out that is ~6 MiB
    # of VMEM -- safe on every generation (16 MiB scoped default on v5e,
    # 32 MiB on v6e/v7x) -- while being large enough to amortize the ~0.35 us
    # per-grid-step overhead and sit near HBM roofline.
    cap = max(8, (1 << 20) // (4 * lanes))
    if rows <= cap:
        return rows  # small arrays: one full-extent block
    start = cap - cap % 8
    for cand in range(start, 7, -8):  # largest multiple-of-8 divisor <= cap
        if rows % cand == 0:
            return cand
    return rows  # pathological row counts: single full-extent block


def noise_2_forward(inp, noise_key, std, had_noise=None):
    """inp: float NCHW array.  noise_key: jax PRNG key.  had_noise: optional
    array of the same shape (the external RF-impairment delta); None means a
    zero contribution and its HBM traffic is skipped entirely."""
    orig_shape = inp.shape
    orig_dtype = inp.dtype
    total = inp.size

    rows, lanes = _pick_layout(total)
    half = lanes // 2
    x2 = inp.reshape(rows, lanes).astype(jnp.float32)

    # 32 random bits per output element, split across the two Box-Muller
    # uniforms (each covers half of the lanes).  Viewed as int32 so all
    # in-kernel integer ops stay on signed types (portable on Mosaic).
    bits = jax.random.bits(noise_key, (2, rows, half), dtype=jnp.uint32)
    bits = jax.lax.bitcast_convert_type(bits, jnp.int32)
    b1, b2 = bits[0], bits[1]

    tile_rows = _pick_tile_rows(rows, lanes)
    grid = (rows // tile_rows,)

    full_spec = pl.BlockSpec((tile_rows, lanes), lambda i: (i, 0))
    half_spec = pl.BlockSpec((tile_rows, half), lambda i: (i, 0))

    operands = [x2, b1, b2]
    in_specs = [full_spec, half_spec, half_spec]
    has_hn = had_noise is not None
    if has_hn:
        operands.append(had_noise.reshape(rows, lanes).astype(jnp.float32))
        in_specs.append(full_spec)

    out2 = pl.pallas_call(
        functools.partial(_noise_kernel, std=float(std), has_hn=has_hn),
        out_shape=jax.ShapeDtypeStruct((rows, lanes), jnp.float32),
        grid=grid,
        in_specs=in_specs,
        out_specs=full_spec,
        compiler_params=pltpu.CompilerParams(
            # Tiles are fully independent (noise bits arrive as data), so the
            # grid axis can be sharded across both TensorCores on v7x.
            dimension_semantics=("parallel",),
        ),
    )(*operands)
    return out2.reshape(orig_shape).astype(orig_dtype)


if __name__ == "__main__":
    key = jax.random.PRNGKey(0)
    k_x, k_noise = jax.random.split(key)

    N, C, H, W = 2, 4, 16, 16  # matches Noise_2(size=(2, 4, 16, 16), std=0.1)
    std = 0.1

    x = jax.random.normal(k_x, (N, C, H, W), dtype=jnp.float32)

    # TODO(synk): `had_noise` in the original module comes from an external
    # python2 RF-impairment subprocess (file round-trip + os.system); no Pallas
    # equivalent, so it stays an optional tensor input (None == zero here).
    out = noise_2_forward(x, k_noise, std, had_noise=None)
    jax.block_until_ready(out)

    assert out.shape == x.shape and out.dtype == jnp.float32
    assert bool(jnp.isfinite(out).all())
    noise = (out - x).ravel()
    assert abs(float(noise.mean())) < 0.02            # mean ~ 0
    assert abs(float(noise.std()) - std) < 0.03       # std ~ 0.1
    print("KERNEL_OK")
</pallas_src>

<mosaic_0001>
module attributes {stable_mosaic.version = 11 : i64} {
  func.func @_noise_kernel(%arg0: i32, %arg1: memref<2x1024xf32, #tpu.memory_space<vmem>>, %arg2: memref<2x512xi32, #tpu.memory_space<vmem>>, %arg3: memref<2x512xi32, #tpu.memory_space<vmem>>, %arg4: memref<2x1024xf32, #tpu.memory_space<vmem>>) attributes {dimension_semantics = [#tpu.dimension_semantics<parallel>], iteration_bounds = array<i64: 1>, scalar_prefetch = 0 : i64, scratch_operands = 0 : i64, tpu.core_type = #tpu.core_type<tc>, window_params = [{transform_indices = @transform_0, window_bounds = array<i64: 2, 1024>}, {transform_indices = @transform_1, window_bounds = array<i64: 2, 512>}, {transform_indices = @transform_2, window_bounds = array<i64: 2, 512>}, {transform_indices = @transform_3, window_bounds = array<i64: 2, 1024>}]} {
    %c0 = arith.constant 0 : index
    %c0_0 = arith.constant 0 : index
    %0 = vector.load %arg2[%c0, %c0_0] : memref<2x512xi32, #tpu.memory_space<vmem>>, vector<2x512xi32>
    %c9_i32 = arith.constant 9 : i32
    %1 = vector.broadcast %c9_i32 : i32 to vector<2x512xi32>
    %2 = arith.shrsi %0, %1 : vector<2x512xi32>
    %c8388607_i32 = arith.constant 8388607 : i32
    %3 = vector.broadcast %c8388607_i32 : i32 to vector<2x512xi32>
    %4 = arith.andi %2, %3 : vector<2x512xi32>
    %5 = arith.sitofp %4 : vector<2x512xi32> to vector<2x512xf32>
    %cst = arith.constant 5.000000e-01 : f32
    %6 = vector.broadcast %cst : f32 to vector<2x512xf32>
    %7 = arith.addf %5, %6 : vector<2x512xf32>
    %cst_1 = arith.constant 1.1920929E-7 : f32
    %8 = vector.broadcast %cst_1 : f32 to vector<2x512xf32>
    %9 = arith.mulf %7, %8 : vector<2x512xf32>
    %c0_2 = arith.constant 0 : index
    %c0_3 = arith.constant 0 : index
    %10 = vector.load %arg3[%c0_2, %c0_3] : memref<2x512xi32, #tpu.memory_space<vmem>>, vector<2x512xi32>
    %c9_i32_4 = arith.constant 9 : i32
    %11 = vector.broadcast %c9_i32_4 : i32 to vector<2x512xi32>
    %12 = arith.shrsi %10, %11 : vector<2x512xi32>
    %c8388607_i32_5 = arith.constant 8388607 : i32
    %13 = vector.broadcast %c8388607_i32_5 : i32 to vector<2x512xi32>
    %14 = arith.andi %12, %13 : vector<2x512xi32>
    %15 = arith.sitofp %14 : vector<2x512xi32> to vector<2x512xf32>
    %cst_6 = arith.constant 5.000000e-01 : f32
    %16 = vector.broadcast %cst_6 : f32 to vector<2x512xf32>
    %17 = arith.addf %15, %16 : vector<2x512xf32>
    %cst_7 = arith.constant 1.1920929E-7 : f32
    %18 = vector.broadcast %cst_7 : f32 to vector<2x512xf32>
    %19 = arith.mulf %17, %18 : vector<2x512xf32>
    %20 = math.log %9 : vector<2x512xf32>
    %cst_8 = arith.constant -2.000000e+00 : f32
    %21 = vector.broadcast %cst_8 : f32 to vector<2x512xf32>
    %22 = arith.mulf %21, %20 : vector<2x512xf32>
    %23 = math.sqrt %22 : vector<2x512xf32>
    %cst_9 = arith.constant 1.000000e-01 : f32
    %24 = vector.broadcast %cst_9 : f32 to vector<2x512xf32>
    %25 = arith.mulf %24, %23 : vector<2x512xf32>
    %cst_10 = arith.constant 6.28318548 : f32
    %26 = vector.broadcast %cst_10 : f32 to vector<2x512xf32>
    %27 = arith.mulf %26, %19 : vector<2x512xf32>
    %28 = math.cos %27 : vector<2x512xf32>
    %29 = arith.mulf %25, %28 : vector<2x512xf32>
    %30 = math.sin %27 : vector<2x512xf32>
    %31 = arith.mulf %25, %30 : vector<2x512xf32>
    %c0_11 = arith.constant 0 : index
    %c0_12 = arith.constant 0 : index
    %32 = vector.load %arg1[%c0_11, %c0_12] : memref<2x1024xf32, #tpu.memory_space<vmem>>, vector<2x512xf32>
    %33 = arith.addf %32, %29 : vector<2x512xf32>
    %c0_13 = arith.constant 0 : index
    %c512 = arith.constant 512 : index
    %34 = vector.load %arg1[%c0_13, %c512] : memref<2x1024xf32, #tpu.memory_space<vmem>>, vector<2x512xf32>
    %35 = arith.addf %34, %31 : vector<2x512xf32>
    %c0_14 = arith.constant 0 : index
    %c0_15 = arith.constant 0 : index
    %36 = vector.load %arg4[%c0_14, %c0_15] : memref<2x1024xf32, #tpu.memory_space<vmem>>, vector<2x512xf32>
    tpu.vector_store %arg4[%c0_14, %c0_15], %33 {strides = array<i32>} : memref<2x1024xf32, #tpu.memory_space<vmem>>, vector<2x512xf32>,
    %c0_16 = arith.constant 0 : index
    %c512_17 = arith.constant 512 : index
    %37 = vector.load %arg4[%c0_16, %c512_17] : memref<2x1024xf32, #tpu.memory_space<vmem>>, vector<2x512xf32>
    tpu.vector_store %arg4[%c0_16, %c512_17], %35 {strides = array<i32>} : memref<2x1024xf32, #tpu.memory_space<vmem>>, vector<2x512xf32>,
    return
  }
  func.func @transform_0(%arg0: i32) -> (i32, i32) {
    %c0_i32 = arith.constant 0 : i32
    %c0_i32_0 = arith.constant 0 : i32
    return %arg0, %c0_i32 : i32, i32
  }
  func.func @transform_1(%arg0: i32) -> (i32, i32) {
    %c0_i32 = arith.constant 0 : i32
    %c0_i32_0 = arith.constant 0 : i32
    return %arg0, %c0_i32 : i32, i32
  }
  func.func @transform_2(%arg0: i32) -> (i32, i32) {
    %c0_i32 = arith.constant 0 : i32
    %c0_i32_0 = arith.constant 0 : i32
    return %arg0, %c0_i32 : i32, i32
  }
  func.func @transform_3(%arg0: i32) -> (i32, i32) {
    %c0_i32 = arith.constant 0 : i32
    %c0_i32_0 = arith.constant 0 : i32
    return %arg0, %c0_i32 : i32, i32
  }
}

</mosaic_0001>

<llo_original>
// kernel: tpu_custom_call.1
$region0: #{tpu_custom_call.1}
  #allocation0 [shape = 'u32[]', space=smem, size = 0x4, offset = 0x4, fixed_abs, tag = 'smem constant byte address 0x4 - core index']
  #allocation1 [shape = 'u32[72,128]{1,0:T(1,128)}', space=vmem, size = 0x9000, scoped, tag = 'internal scratch']
  %s0 = inlined_call_operand.hbm [shape: f32[2,1024], index: 0, kind: input, shape index: {}]
  %s1 = inlined_call_operand.hbm [shape: s32[2,512], index: 1, kind: input, shape index: {}]
  %s2 = inlined_call_operand.hbm [shape: s32[2,512], index: 2, kind: input, shape index: {}]
  %s3 = inlined_call_operand.hbm [shape: f32[2,1024], index: 3, kind: output, shape index: {}]
  %s4 = sld [smem:[#allocation0]]
  $region34: #{tpu_custom_call.1} parent=0
    _
  %s6 = ssub.s32 1, %s4
  %s7 = scalar_select 0, %s6, %s4
  $region1: #{tpu_custom_call.1} parent=0
    #allocation2 [shape = 'u8[8192]{0}', space=vmem, size = 0x2000, scoped, tag = 'input window, operand 0, single buffered']
    #allocation3 [shape = 's32[1]{0}', space=sflag, size = 0x4, scoped, tag = 'scoped memory for tpu_custom_call.1']
    #allocation4 [shape = 's32[1]{0}', space=sflag, size = 0x4, scoped, tag = 'scoped memory for tpu_custom_call.1']
    #allocation5 [shape = 'u8[4096]{0}', space=vmem, size = 0x1000, scoped, tag = 'input window, operand 1, single buffered']
    #allocation6 [shape = 's32[1]{0}', space=sflag, size = 0x4, scoped, tag = 'scoped memory for tpu_custom_call.1']
    #allocation7 [shape = 'u8[4096]{0}', space=vmem, size = 0x1000, scoped, tag = 'input window, operand 2, single buffered']
    #allocation8 [shape = 'u8[8192]{0}', space=vmem, size = 0x2000, scoped, tag = 'output window, operand 0, single buffered']
    %8 = vsyncpa [#allocation3], 0
    %9 = vsyncpa [#allocation6], 0
    %10 = vsyncpa [#allocation4], 0
    // Predicated region
    $region2: #{tpu_custom_call.1} parent=1 // pred_check
      _
    $region3: #{tpu_custom_call.1} parent=1 // pred_check_branch
      %12 = sbr.rel (0) target = $region5
    $region4: #{tpu_custom_call.1} parent=1 // pred_region
      %14 = vsyncadd [#allocation3], 0
      %s16 = sshll.u32 %s0, 4
      %s17 = int_to_ptr.hbm [resolvable:$true] %s16
      %s18 = sshll.u32 [#allocation2], 4
      %s19 = int_to_ptr.vmem [resolvable:$true] %s18
      %21 = dma.hbm_to_vmem [thread:$0]  %s17, 256, %s19, [#allocation3]
    $region5: #{tpu_custom_call.1} parent=1 // pred_fallthru
      _
    // Predicated region
    $region6: #{tpu_custom_call.1} parent=1 // pred_check
      _
    $region7: #{tpu_custom_call.1} parent=1 // pred_check_branch
      %23 = sbr.rel (0) target = $region9
    $region8: #{tpu_custom_call.1} parent=1 // pred_region
      %25 = vsyncadd [#allocation6], 0
      %s27 = sshll.u32 %s1, 4
      %s28 = int_to_ptr.hbm [resolvable:$true] %s27
      %s29 = sshll.u32 [#allocation5], 4
      %s30 = int_to_ptr.vmem [resolvable:$true] %s29
      %32 = dma.hbm_to_vmem [thread:$0]  %s28, 128, %s30, [#allocation6]
    $region9: #{tpu_custom_call.1} parent=1 // pred_fallthru
      _
    // Predicated region
    $region10: #{tpu_custom_call.1} parent=1 // pred_check
      _
    $region11: #{tpu_custom_call.1} parent=1 // pred_check_branch
      %34 = sbr.rel (0) target = $region13
    $region12: #{tpu_custom_call.1} parent=1 // pred_region
      %36 = vsyncadd [#allocation6], 0
      %s38 = sshll.u32 %s2, 4
      %s39 = int_to_ptr.hbm [resolvable:$true] %s38
      %s40 = sshll.u32 [#allocation7], 4
      %s41 = int_to_ptr.vmem [resolvable:$true] %s40
      %43 = dma.hbm_to_vmem [thread:$0]  %s39, 128, %s41, [#allocation6]
    $region13: #{tpu_custom_call.1} parent=1 // pred_fallthru
      _
    // Predicated region
    $region14: #{tpu_custom_call.1} parent=1 // pred_check
      _
    $region15: #{tpu_custom_call.1} parent=1 // pred_check_branch
      %45 = sbr.rel (0) target = $region17
    $region16: #{tpu_custom_call.1} parent=1 // pred_region
      %47 = dma.done [#allocation3], 256
    $region17: #{tpu_custom_call.1} parent=1 // pred_fallthru
      _
    // Predicated region
    $region18: #{tpu_custom_call.1} parent=1 // pred_check
      _
    $region19: #{tpu_custom_call.1} parent=1 // pred_check_branch
      %49 = sbr.rel (0) target = $region21
    $region20: #{tpu_custom_call.1} parent=1 // pred_region
      %51 = dma.done [#allocation6], 128
    $region21: #{tpu_custom_call.1} parent=1 // pred_fallthru
      _
    // Predicated region
    $region22: #{tpu_custom_call.1} parent=1 // pred_check
      _
    $region23: #{tpu_custom_call.1} parent=1 // pred_check_branch
      %53 = sbr.rel (0) target = $region25
    $region24: #{tpu_custom_call.1} parent=1 // pred_region
      %55 = dma.done [#allocation6], 128
    $region25: #{tpu_custom_call.1} parent=1 // pred_fallthru
      _
    %v56 = vld [vmem:[#allocation5] sm:$0xff]
    %v57 = vshra.s32 %v56, 9
    %v58 = vand.u32 %v57, 8388607
    %v59 = vcvt.s32.f32 %v58
    %v60 = vadd.f32 %v59, 0.5
    %v61 = vmul.f32 %v60, 1.1920929e-07
    %v62 = vld [vmem:[#allocation7] sm:$0xff]
    %v63 = vshra.s32 %v62, 9
    %v64 = vand.u32 %v63, 8388607
    %v65 = vcvt.s32.f32 %v64
    %v66 = vadd.f32 %v65, 0.5
    %v67 = vmul.f32 %v66, 1.1920929e-07
    %v68 = vlog2.pop %v61
    %v69 = vmul.f32 %v68, 0.6931472
    %v70 = vmul.f32 %v69, -2.0
    %v71 = vrsqrt.pop %v70
    %v72 = vmul.f32 %v71, %v70
    %v73 = vmul.f32 %v72, %v71
    %v74 = vmul.f32 0.5, %v73
    %v75 = vsub.f32 1.5, %v74
    %v76 = vmul.f32 %v71, %v75
    %v77 = vmul.f32 %v70, %v76
    %vm78 = vcmp.eq.f32.partialorder %v70, inf
    %v79 = vsel %vm78, %v70, %v77
    %vm80 = vcmp.eq.f32.partialorder %v70, 0.0
    %v81 = vand.u32 %v70, 2147483648
    %v82 = vsel %vm80, %v81, %v79
    %v83 = vmul.f32 %v82, 0.1
    %v84 = vmul.f32 %v67, 6.2831855
    %v85 = vand.u32 2147483647, %v84
    %vm86 = vcmp.le.f32.partialorder %v85, 0.7853982
    %vm87 = vcmp.lt.s32.totalorder %v84, 0
    %v88 = vand.u32 %v84, 2139095040
    %v89 = vshrl.u32 %v88, 23
    %v90 = vsub.s32 %v89, 127
    %v91 = vand.u32 2147483647, %v84
    %v92 = vand.u32 %v91, 8388607
    %v93 = vor.u32 %v92, 8388608
    %v94 = vsub.s32 0, %v93
    %v95 = vadd.s32 %v90, 1
    %vm96 = vcmp.gt.s32.totalorder %v95, 0
    %v97 = vsel %vm96, %v95, 0
    %v98 = vshrl.u32 %v97, 5
    %v99 = vand.u32 %v97, 31
    %v100 = vsub.s32 32, %v99
    %v101 = vshrl.u32 683565275, %v100
    %v102 = vshll.u32 683565275, %v99
    %v103 = vshrl.u32 2475754826, %v100
    %v104 = vor.u32 %v102, %v103
    %v105 = vshll.u32 2475754826, %v99
    %v106 = vshrl.u32 2131351028, %v100
    %v107 = vor.u32 %v105, %v106
    %v108 = vshll.u32 2131351028, %v99
    %v109 = vshrl.u32 2102212464, %v100
    %v110 = vor.u32 %v108, %v109
    %v111 = vshll.u32 2102212464, %v99
    %v112 = vshrl.u32 920167782, %v100
    %v113 = vor.u32 %v111, %v112
    %v114 = vshll.u32 920167782, %v99
    %v115 = vshrl.u32 1326507024, %v100
    %v116 = vor.u32 %v114, %v115
    %vm117 = vcmp.lt.s32.totalorder %v98, 1
    %vm118 = vcmp.lt.s32.totalorder %v98, 2
    %vm119 = vcmp.lt.s32.totalorder %v98, 3
    %vm120 = vcmp.lt.s32.totalorder %v98, 4
    %v121 = vsel %vm117, %v101, %v104
    %v122 = vsel %vm120, %v110, 2102212464
    %v123 = vsel %vm119, %v107, %v122
    %v124 = vsel %vm118, %v121, %v123
    %v125 = vsel %vm117, %v104, %v107
    %v126 = vsel %vm120, %v113, 920167782
    %v127 = vsel %vm119, %v110, %v126
    %v128 = vsel %vm118, %v125, %v127
    %v129 = vsel %vm117, %v107, %v110
    %v130 = vsel %vm120, %v116, 1326507024
    %v131 = vsel %vm119, %v113, %v130
    %v132 = vsel %vm118, %v129, %v131
    %v133 = vshll.u32 %v93, 8
    %v134 = vand.u32 %v133, 65535
    %v135 = vshrl.u32 %v133, 16
    %v136 = vand.u32 %v132, 65535
    %v137 = vshrl.u32 %v132, 16
    %v138 = vmul.u32 %v134, %v136
    %v139 = vmul.u32 %v134, %v137
    %v140 = vmul.u32 %v135, %v136
    %v141 = vmul.u32 %v135, %v137
    %v142 = vshll.u32 %v139, 16
    %v143 = vshrl.u32 %v139, 16
    %v144 = vshll.u32 %v140, 16
    %v145 = vshrl.u32 %v140, 16
    %vm146 = vc.u32 %v138, %v142
    %v147 = vsel %vm146, 1, 0
    %v148 = vadd.s32 %v138, %v142
    %v149 = vadd.s32 %v141, %v147
    %vm150 = vc.u32 %v148, %v144
    %v151 = vsel %vm150, 1, 0
    %v152 = vadd.s32 %v148, %v144
    %v153 = vadd.s32 %v149, %v151
    %v154 = vadd.s32 %v153, %v143
    %v155 = vadd.s32 %v154, %v145
    %v156 = vand.u32 %v133, 65535
    %v157 = vshrl.u32 %v133, 16
    %v158 = vand.u32 %v128, 65535
    %v159 = vshrl.u32 %v128, 16
    %v160 = vmul.u32 %v156, %v158
    %v161 = vmul.u32 %v156, %v159
    %v162 = vmul.u32 %v157, %v158
    %v163 = vmul.u32 %v157, %v159
    %v164 = vshll.u32 %v161, 16
    %v165 = vshrl.u32 %v161, 16
    %v166 = vshll.u32 %v162, 16
    %v167 = vshrl.u32 %v162, 16
    %vm168 = vc.u32 %v160, %v164
    %v169 = vsel %vm168, 1, 0
    %v170 = vadd.s32 %v160, %v164
    %v171 = vadd.s32 %v163, %v169
    %vm172 = vc.u32 %v170, %v166
    %v173 = vsel %vm172, 1, 0
    %v174 = vadd.s32 %v170, %v166
    %v175 = vadd.s32 %v171, %v173
    %v176 = vadd.s32 %v175, %v165
    %v177 = vadd.s32 %v176, %v167
    %v178 = vmul.u32 %v133, %v124
    %v179 = vadd.s32 %v155, %v174
    %vm180 = vc.u32 %v155, %v174
    %v181 = vadd.s32 %v177, 1
    %v182 = vsel %vm180, %v181, %v177
    %v183 = vadd.s32 %v178, %v182
    %v184 = vadd.s32 %v183, 536870912
    %v185 = vshrl.u32 %v184, 30
    %v186 = vshll.u32 %v185, 30
    %v187 = vsub.s32 %v183, %v186
    %vm188 = vcmp.lt.s32.totalorder %v187, 0
    %v189 = vsub.s32 0, %v187
    %v190 = vsel %vm188, %v189, %v187
    %v191 = vclz %v190
    %v192 = vsub.s32 %v191, 2
    %vm193 = vcmp.gt.s32.totalorder 0, %v192
    %v194 = vsel %vm193, 0, %v192
    %v195 = vsub.s32 32, %v194
    %v196 = vshll.u32 %v187, %v194
    %v197 = vshrl.u32 %v179, %v195
    %v198 = vor.u32 %v196, %v197
    %v199 = vsub.s32 4294967266, %v194
    %v200 = vadd.s32 %v199, 127
    %v201 = vshll.u32 %v200, 23
    %v202 = vor.u32 4788187, %v201
    %v203 = vand.u32 2147483647, %v202
    %v205 = vcvt.s32.f32 %v198
    %v206 = vmul.f32 %v205, %v203
    %v207 = vxor.u32 %v206, 2147483648
    %v208 = vsel %vm87, %v207, %v206
    %v209 = vsub.s32 4, %v185
    %v210 = vsel %vm87, %v209, %v185
    %v211 = vsel %vm86, %v84, %v208
    %v212 = vsel %vm86, 0, %v210
    %v213 = vmul.f32 %v211, %v211
    %v214 = vmul.f32 %v213, -0.001358992
    %v215 = vadd.f32 %v214, 0.041655596
    %v216 = vmul.f32 %v213, %v215
    %v217 = vadd.f32 %v216, -0.4999988
    %v218 = vmul.f32 %v213, %v217
    %v219 = vadd.f32 1.0, %v218
    %v220 = vmul.f32 %v211, %v211
    %v221 = vmul.f32 %v220, -0.00019511016
    %v222 = vadd.f32 %v221, 0.008332121
    %v223 = vmul.f32 %v220, %v222
    %v224 = vadd.f32 %v223, -0.16666654
    %v225 = vmul.f32 %v220, %v224
    %v226 = vadd.f32 %v225, 1.0
    %v227 = vmul.f32 %v226, %v211
    %vm228 = vweird.f32 %v84
    %v229 = vand.u32 %v212, 3
    %vm230 = vcmp.lt.s32.totalorder %v229, 2
    %vm231 = vcmp.eq.s32.totalorder %v229, 0
    %v232 = vxor.u32 %v227, 2147483648
    %v233 = vsel %vm231, %v219, %v232
    %vm234 = vcmp.eq.s32.totalorder %v229, 2
    %v235 = vxor.u32 %v219, 2147483648
    %v236 = vsel %vm234, %v235, %v227
    %v237 = vsel %vm230, %v233, %v236
    %v238 = vsel %vm228, nan, %v237
    %v239 = vmul.f32 %v83, %v238
    %v240 = vand.u32 2147483647, %v84
    %vm241 = vcmp.le.f32.partialorder %v240, 0.7853982
    %vm242 = vcmp.lt.s32.totalorder %v84, 0
    %v243 = vand.u32 %v84, 2139095040
    %v244 = vshrl.u32 %v243, 23
    %v245 = vsub.s32 %v244, 127
    %v246 = vand.u32 2147483647, %v84
    %v247 = vand.u32 %v246, 8388607
    %v248 = vor.u32 %v247, 8388608
    %v249 = vsub.s32 0, %v248
    %v250 = vadd.s32 %v245, 1
    %vm251 = vcmp.gt.s32.totalorder %v250, 0
    %v252 = vsel %vm251, %v250, 0
    %v253 = vshrl.u32 %v252, 5
    %v254 = vand.u32 %v252, 31
    %v255 = vsub.s32 32, %v254
    %v256 = vshrl.u32 683565275, %v255
    %v257 = vshll.u32 683565275, %v254
    %v258 = vshrl.u32 2475754826, %v255
    %v259 = vor.u32 %v257, %v258
    %v260 = vshll.u32 2475754826, %v254
    %v261 = vshrl.u32 2131351028, %v255
    %v262 = vor.u32 %v260, %v261
    %v263 = vshll.u32 2131351028, %v254
    %v264 = vshrl.u32 2102212464, %v255
    %v265 = vor.u32 %v263, %v264
    %v266 = vshll.u32 2102212464, %v254
    %v267 = vshrl.u32 920167782, %v255
    %v268 = vor.u32 %v266, %v267
    %v269 = vshll.u32 920167782, %v254
    %v270 = vshrl.u32 1326507024, %v255
    %v271 = vor.u32 %v269, %v270
    %vm272 = vcmp.lt.s32.totalorder %v253, 1
    %vm273 = vcmp.lt.s32.totalorder %v253, 2
    %vm274 = vcmp.lt.s32.totalorder %v253, 3
    %vm275 = vcmp.lt.s32.totalorder %v253, 4
    %v276 = vsel %vm272, %v256, %v259
    %v277 = vsel %vm275, %v265, 2102212464
    %v278 = vsel %vm274, %v262, %v277
    %v279 = vsel %vm273, %v276, %v278
    %v280 = vsel %vm272, %v259, %v262
    %v281 = vsel %vm275, %v268, 920167782
    %v282 = vsel %vm274, %v265, %v281
    %v283 = vsel %vm273, %v280, %v282
    %v284 = vsel %vm272, %v262, %v265
    %v285 = vsel %vm275, %v271, 1326507024
    %v286 = vsel %vm274, %v268, %v285
    %v287 = vsel %vm273, %v284, %v286
    %v288 = vshll.u32 %v248, 8
    %v289 = vand.u32 %v288, 65535
    %v290 = vshrl.u32 %v288, 16
    %v291 = vand.u32 %v287, 65535
    %v292 = vshrl.u32 %v287, 16
    %v293 = vmul.u32 %v289, %v291
    %v294 = vmul.u32 %v289, %v292
    %v295 = vmul.u32 %v290, %v291
    %v296 = vmul.u32 %v290, %v292
    %v297 = vshll.u32 %v294, 16
    %v298 = vshrl.u32 %v294, 16
    %v299 = vshll.u32 %v295, 16
    %v300 = vshrl.u32 %v295, 16
    %vm301 = vc.u32 %v293, %v297
    %v302 = vsel %vm301, 1, 0
    %v303 = vadd.s32 %v293, %v297
    %v304 = vadd.s32 %v296, %v302
    %vm305 = vc.u32 %v303, %v299
    %v306 = vsel %vm305, 1, 0
    %v307 = vadd.s32 %v303, %v299
    %v308 = vadd.s32 %v304, %v306
    %v309 = vadd.s32 %v308, %v298
    %v310 = vadd.s32 %v309, %v300
    %v311 = vand.u32 %v288, 65535
    %v312 = vshrl.u32 %v288, 16
    %v313 = vand.u32 %v283, 65535
    %v314 = vshrl.u32 %v283, 16
    %v315 = vmul.u32 %v311, %v313
    %v316 = vmul.u32 %v311, %v314
    %v317 = vmul.u32 %v312, %v313
    %v318 = vmul.u32 %v312, %v314
    %v319 = vshll.u32 %v316, 16
    %v320 = vshrl.u32 %v316, 16
    %v321 = vshll.u32 %v317, 16
    %v322 = vshrl.u32 %v317, 16
    %vm323 = vc.u32 %v315, %v319
    %v324 = vsel %vm323, 1, 0
    %v325 = vadd.s32 %v315, %v319
    %v326 = vadd.s32 %v318, %v324
    %vm327 = vc.u32 %v325, %v321
    %v328 = vsel %vm327, 1, 0
    %v329 = vadd.s32 %v325, %v321
    %v330 = vadd.s32 %v326, %v328
    %v331 = vadd.s32 %v330, %v320
    %v332 = vadd.s32 %v331, %v322
    %v333 = vmul.u32 %v288, %v279
    %v334 = vadd.s32 %v310, %v329
    %vm335 = vc.u32 %v310, %v329
    %v336 = vadd.s32 %v332, 1
    %v337 = vsel %vm335, %v336, %v332
    %v338 = vadd.s32 %v333, %v337
    %v339 = vadd.s32 %v338, 536870912
    %v340 = vshrl.u32 %v339, 30
    %v341 = vshll.u32 %v340, 30
    %v342 = vsub.s32 %v338, %v341
    %vm343 = vcmp.lt.s32.totalorder %v342, 0
    %v344 = vsub.s32 0, %v342
    %v345 = vsel %vm343, %v344, %v342
    %v346 = vclz %v345
    %v347 = vsub.s32 %v346, 2
    %vm348 = vcmp.gt.s32.totalorder 0, %v347
    %v349 = vsel %vm348, 0, %v347
    %v350 = vsub.s32 32, %v349
    %v351 = vshll.u32 %v342, %v349
    %v352 = vshrl.u32 %v334, %v350
    %v353 = vor.u32 %v351, %v352
    %v354 = vsub.s32 4294967266, %v349
    %v355 = vadd.s32 %v354, 127
    %v356 = vshll.u32 %v355, 23
    %v357 = vor.u32 4788187, %v356
    %v358 = vand.u32 2147483647, %v357
    %v360 = vcvt.s32.f32 %v353
    %v361 = vmul.f32 %v360, %v358
    %v362 = vxor.u32 %v361, 2147483648
    %v363 = vsel %vm242, %v362, %v361
    %v364 = vsub.s32 4, %v340
    %v365 = vsel %vm242, %v364, %v340
    %v366 = vsel %vm241, %v84, %v363
    %v367 = vsel %vm241, 0, %v365
    %v368 = vmul.f32 %v366, %v366
    %v369 = vmul.f32 %v368, -0.001358992
    %v370 = vadd.f32 %v369, 0.041655596
    %v371 = vmul.f32 %v368, %v370
    %v372 = vadd.f32 %v371, -0.4999988
    %v373 = vmul.f32 %v368, %v372
    %v374 = vadd.f32 1.0, %v373
    %v375 = vmul.f32 %v366, %v366
    %v376 = vmul.f32 %v375, -0.00019511016
    %v377 = vadd.f32 %v376, 0.008332121
    %v378 = vmul.f32 %v375, %v377
    %v379 = vadd.f32 %v378, -0.16666654
    %v380 = vmul.f32 %v375, %v379
    %v381 = vadd.f32 %v380, 1.0
    %v382 = vmul.f32 %v381, %v366
    %vm383 = vweird.f32 %v84
    %v384 = vadd.s32 %v367, 3
    %v385 = vand.u32 %v384, 3
    %vm386 = vcmp.lt.s32.totalorder %v385, 2
    %vm387 = vcmp.eq.s32.totalorder %v385, 0
    %v388 = vxor.u32 %v382, 2147483648
    %v389 = vsel %vm387, %v374, %v388
    %vm390 = vcmp.eq.s32.totalorder %v385, 2
    %v391 = vxor.u32 %v374, 2147483648
    %v392 = vsel %vm390, %v391, %v382
    %v393 = vsel %vm386, %v389, %v392
    %v394 = vsel %vm383, nan, %v393
    %v395 = vmul.f32 %v83, %v394
    %v396 = vld [vmem:[#allocation2] sm:$0xff]
    %v397 = vadd.f32 %v396, %v239
    %v398 = vld [vmem:[#allocation2 + $0x8] sm:$0xff]
    %v399 = vadd.f32 %v398, %v395
    %400 = vst [vmem:[#allocation8] sm:$0xff] %v397
    %401 = vst [vmem:[#allocation8 + $0x8] sm:$0xff] %v399
    // Predicated region
    $region26: #{tpu_custom_call.1} parent=1 // pred_check
      _
    $region27: #{tpu_custom_call.1} parent=1 // pred_check_branch
      %403 = sbr.rel (0) target = $region29
    $region28: #{tpu_custom_call.1} parent=1 // pred_region
      %405 = vsyncadd [#allocation4], 0
      %s407 = sshll.u32 [#allocation8], 4
      %s408 = int_to_ptr.vmem [resolvable:$true] %s407
      %s409 = sshll.u32 %s3, 4
      %s410 = int_to_ptr.hbm [resolvable:$true] %s409
      %412 = dma.vmem_to_hbm [thread:$0]  %s408, 256, %s410, [#allocation4]
    $region29: #{tpu_custom_call.1} parent=1 // pred_fallthru
      _
    // Predicated region
    $region30: #{tpu_custom_call.1} parent=1 // pred_check
      _
    $region31: #{tpu_custom_call.1} parent=1 // pred_check_branch
      %414 = sbr.rel (0) target = $region33
    $region32: #{tpu_custom_call.1} parent=1 // pred_region
      %416 = dma.done [#allocation4], 256
    $region33: #{tpu_custom_call.1} parent=1 // pred_fallthru
      _
    %417 = vsyncpa [#allocation3], 1
    %418 = vsyncpa [#allocation6], 1
    %419 = vsyncpa [#allocation4], 1

</llo_original>
